<compile_context>
chip_gen: v5e
topology: v5e:2x2
jax: 0.10.0
libtpu: 0.0.40
codegen_flags: <defaults>
</compile_context>

<pallas_src>
import jax
import jax.numpy as jnp
from jax import lax
from jax.experimental import pallas as pl
from jax.experimental.pallas import tpu as pltpu

_LANE_CHUNK = 256        # batch columns processed per register tile
_GRAIN = _LANE_CHUNK     # batch tiles are multiples of this


def policy_kernel(x_ref, w1_ref, b1_ref, wdT_ref, bd_ref, out_ref):
    # x_ref:   (4, TB)    transposed input tile (batch on the 128-lane axis)
    # w1_ref:  (128, 4)   PyTorch-layout affine1 weight (out, in)  - resident
    # b1_ref:  (128, 1)   affine1 bias column                      - resident
    # wdT_ref: (1, 128)   w2[1,:] - w2[0,:]  (row)                 - resident
    # bd_ref:  (1, 1)     b2[1] - b2[0]
    # out_ref: (2, TB)    [p(class0); p(class1)] per column
    w1 = w1_ref[...]          # (128, 4)
    b1 = b1_ref[...]          # (128, 1)
    wdT = wdT_ref[...]        # (1, 128)
    bd = bd_ref[...]          # (1, 1)

    tile_b = x_ref.shape[1]
    ch = _LANE_CHUNK if tile_b >= _LANE_CHUNK else tile_b
    n_chunks = tile_b // ch   # wrapper guarantees tile_b % ch == 0

    def body(c, carry):
        off = pl.multiple_of(c * ch, ch)
        x = x_ref[:, pl.ds(off, ch)]                       # (4, ch)

        # ---- affine1 as 4 VPU broadcast FMAs (K=4 would waste the MXU) ----
        acc = w1[:, 0:1] * x[0:1, :]
        for k in range(1, 4):
            acc = acc + w1[:, k:k + 1] * x[k:k + 1, :]
        # Dropout(p=0.6) is identity in eval/inference mode.
        # TODO(synk): training-mode dropout via pltpu.prng_seed/prng_random_bits.
        h = jnp.maximum(acc + b1, 0.0)                     # (128, ch), ReLU

        # ---- 2-class softmax == sigmoid of the score difference ----
        # K=128 contraction on the idle MXU instead of VPU mul + XLU reduce.
        d = jnp.dot(wdT, h, preferred_element_type=jnp.float32) + bd  # (1, ch)
        p1 = 1.0 / (1.0 + jnp.exp(-d))   # exact sigmoid (meets 1e-4 tolerance)
        p0 = 1.0 - p1
        out_ref[:, pl.ds(off, ch)] = jnp.concatenate([p0, p1], axis=0)
        return carry

    lax.fori_loop(0, n_chunks, body, 0,
                  unroll=n_chunks if n_chunks <= 8 else 4)


def _round_up(n, m):
    return ((n + m - 1) // m) * m


def policy_forward(x, w1, b1, w2, b2, *, max_tile=16384):
    """x: (B, 4) float32. Weights in PyTorch nn.Linear layout:
       w1 (128, 4), b1 (128,), w2 (2, 128), b2 (2,).
       Returns softmax action probabilities (B, 2)."""
    B = x.shape[0]

    # --- batch tiling: large tiles (amortize per-step overhead), small tail
    # padding, and >= 2 grid steps when possible so v7x megacore uses both TCs.
    b_g = _round_up(max(B, 1), _GRAIN)
    num_tiles = -(-b_g // max_tile)
    if num_tiles < 2 and b_g >= 2 * _GRAIN:
        num_tiles = 2
    tile_b = _round_up(-(-b_g // num_tiles), _GRAIN)
    bp = num_tiles * tile_b

    # Transposed, zero-padded layout: batch lives on the 128-lane axis.
    # TODO(synk): callers that can produce/consume (4,B)/(2,B) directly should
    # skip these wrapper transposes (layout plumbing costs extra HBM passes).
    xT = jnp.pad(x.T.astype(jnp.float32), ((0, 0), (0, bp - B)))
    w1f = w1.astype(jnp.float32)                                    # (128, 4)
    b1c = b1.reshape(128, 1).astype(jnp.float32)                    # (128, 1)
    wdT = (w2[1, :] - w2[0, :]).reshape(1, 128).astype(jnp.float32)  # (1, 128)
    bd = (b2[1] - b2[0]).reshape(1, 1).astype(jnp.float32)          # (1, 1)

    out_t = pl.pallas_call(
        policy_kernel,
        out_shape=jax.ShapeDtypeStruct((2, bp), jnp.float32),
        grid_spec=pltpu.PrefetchScalarGridSpec(
            num_scalar_prefetch=0,
            grid=(num_tiles,),
            in_specs=[
                pl.BlockSpec((4, tile_b), lambda i: (0, i)),   # xT tile
                pl.BlockSpec((128, 4), lambda i: (0, 0)),      # w1 resident
                pl.BlockSpec((128, 1), lambda i: (0, 0)),      # b1 resident
                pl.BlockSpec((1, 128), lambda i: (0, 0)),      # w_diff resident
                pl.BlockSpec((1, 1), lambda i: (0, 0)),        # b_diff resident
            ],
            out_specs=pl.BlockSpec((2, tile_b), lambda i: (0, i)),
        ),
        compiler_params=pltpu.CompilerParams(
            dimension_semantics=("parallel",),      # megacore sharding on v7x
            vmem_limit_bytes=32 * 1024 * 1024,      # safe on v5e/v6e/v7x
        ),
    )(xT, w1f, b1c, wdT, bd)

    return out_t[:, :B].T   # (B, 2)


def init_params(key):
    """PyTorch nn.Linear-shaped params: w (out, in), b (out,)."""
    k1, k2, k3, k4 = jax.random.split(key, 4)
    bound1 = 1.0 / jnp.sqrt(4.0)
    w1 = jax.random.uniform(k1, (128, 4), jnp.float32, -bound1, bound1)
    b1 = jax.random.uniform(k2, (128,), jnp.float32, -bound1, bound1)
    bound2 = 1.0 / jnp.sqrt(128.0)
    w2 = jax.random.uniform(k3, (2, 128), jnp.float32, -bound2, bound2)
    b2 = jax.random.uniform(k4, (2,), jnp.float32, -bound2, bound2)
    return w1, b1, w2, b2


def reference(x, w1, b1, w2, b2):
    h = jnp.maximum(x @ w1.T + b1, 0.0)
    scores = h @ w2.T + b2
    return jax.nn.softmax(scores, axis=1)


if __name__ == "__main__":
    key = jax.random.PRNGKey(0)
    k_x, k_p = jax.random.split(key)
    w1, b1, w2, b2 = init_params(k_p)

    # Small shape implied by the module (batch=2, 4 features).
    B = 2
    x = jax.random.normal(k_x, (B, 4), jnp.float32)
    probs = policy_forward(x, w1, b1, w2, b2)
    jax.block_until_ready(probs)
    ref = reference(x, w1, b1, w2, b2)
    assert probs.shape == (B, 2)
    assert jnp.allclose(probs, ref, atol=1e-4), (probs, ref)
    assert jnp.allclose(jnp.sum(probs, axis=1), 1.0, atol=1e-4)

    # Larger batch: exercises multi-tile grid (>=2 steps), chunk loop, padding.
    B2 = 2560
    x2 = jax.random.normal(k_x, (B2, 4), jnp.float32)
    probs2 = policy_forward(x2, w1, b1, w2, b2)
    jax.block_until_ready(probs2)
    ref2 = reference(x2, w1, b1, w2, b2)
    assert probs2.shape == (B2, 2)
    assert jnp.allclose(probs2, ref2, atol=1e-4)
    assert jnp.allclose(jnp.sum(probs2, axis=1), 1.0, atol=1e-4)

    print("KERNEL_OK")
</pallas_src>

<mosaic_0001>
module attributes {stable_mosaic.version = 11 : i64} {
  func.func @policy_kernel(%arg0: i32, %arg1: memref<4x256xf32, #tpu.memory_space<vmem>>, %arg2: memref<128x4xf32, #tpu.memory_space<vmem>>, %arg3: memref<128x1xf32, #tpu.memory_space<vmem>>, %arg4: memref<1x128xf32, #tpu.memory_space<vmem>>, %arg5: memref<1x1xf32, #tpu.memory_space<vmem>>, %arg6: memref<2x256xf32, #tpu.memory_space<vmem>>) attributes {dimension_semantics = [#tpu.dimension_semantics<parallel>], iteration_bounds = array<i64: 1>, scalar_prefetch = 0 : i64, scratch_operands = 0 : i64, tpu.core_type = #tpu.core_type<tc>, window_params = [{transform_indices = @transform_0, window_bounds = array<i64: 4, 256>}, {pipeline_mode = #tpu.pipeline_mode<synchronous>, transform_indices = @transform_1, window_bounds = array<i64: 128, 4>}, {pipeline_mode = #tpu.pipeline_mode<synchronous>, transform_indices = @transform_2, window_bounds = array<i64: 128, 1>}, {pipeline_mode = #tpu.pipeline_mode<synchronous>, transform_indices = @transform_3, window_bounds = array<i64: 1, 128>}, {pipeline_mode = #tpu.pipeline_mode<synchronous>, transform_indices = @transform_4, window_bounds = array<i64: 1, 1>}, {transform_indices = @transform_5, window_bounds = array<i64: 2, 256>}]} {
    %c0 = arith.constant 0 : index
    %c0_0 = arith.constant 0 : index
    %0 = vector.load %arg2[%c0, %c0_0] : memref<128x4xf32, #tpu.memory_space<vmem>>, vector<128x4xf32>
    %c0_1 = arith.constant 0 : index
    %c0_2 = arith.constant 0 : index
    %1 = vector.load %arg3[%c0_1, %c0_2] : memref<128x1xf32, #tpu.memory_space<vmem>>, vector<128x1xf32>
    %c0_3 = arith.constant 0 : index
    %c0_4 = arith.constant 0 : index
    %2 = vector.load %arg4[%c0_3, %c0_4] : memref<1x128xf32, #tpu.memory_space<vmem>>, vector<1x128xf32>
    %c0_5 = arith.constant 0 : index
    %c0_6 = arith.constant 0 : index
    %3 = vector.load %arg5[%c0_5, %c0_6] : memref<1x1xf32, #tpu.memory_space<vmem>>, vector<1x1xf32>
    %c0_i32 = arith.constant 0 : i32
    %c256_i32 = arith.constant 256 : i32
    %4 = arith.muli %c0_i32, %c256_i32 : i32
    %5 = tpu.assume_multiple %4, 256 : i32
    %c0_7 = arith.constant 0 : index
    %6 = arith.index_cast %5 : i32 to index
    %7 = vector.load %arg1[%c0_7, %6] : memref<4x256xf32, #tpu.memory_space<vmem>>, vector<4x256xf32>
    %8 = vector.extract_strided_slice %0 {offsets = [0, 0], sizes = [128, 1], strides = [1, 1]} : vector<128x4xf32> to vector<128x1xf32>
    %9 = vector.extract_strided_slice %7 {offsets = [0, 0], sizes = [1, 256], strides = [1, 1]} : vector<4x256xf32> to vector<1x256xf32>
    %10 = vector.broadcast %8 : vector<128x1xf32> to vector<128x256xf32>
    %11 = vector.broadcast %9 : vector<1x256xf32> to vector<128x256xf32>
    %12 = arith.mulf %10, %11 : vector<128x256xf32>
    %13 = vector.extract_strided_slice %0 {offsets = [0, 1], sizes = [128, 1], strides = [1, 1]} : vector<128x4xf32> to vector<128x1xf32>
    %14 = vector.extract_strided_slice %7 {offsets = [1, 0], sizes = [1, 256], strides = [1, 1]} : vector<4x256xf32> to vector<1x256xf32>
    %15 = vector.broadcast %13 : vector<128x1xf32> to vector<128x256xf32>
    %16 = vector.broadcast %14 : vector<1x256xf32> to vector<128x256xf32>
    %17 = arith.mulf %15, %16 : vector<128x256xf32>
    %18 = arith.addf %12, %17 : vector<128x256xf32>
    %19 = vector.extract_strided_slice %0 {offsets = [0, 2], sizes = [128, 1], strides = [1, 1]} : vector<128x4xf32> to vector<128x1xf32>
    %20 = vector.extract_strided_slice %7 {offsets = [2, 0], sizes = [1, 256], strides = [1, 1]} : vector<4x256xf32> to vector<1x256xf32>
    %21 = vector.broadcast %19 : vector<128x1xf32> to vector<128x256xf32>
    %22 = vector.broadcast %20 : vector<1x256xf32> to vector<128x256xf32>
    %23 = arith.mulf %21, %22 : vector<128x256xf32>
    %24 = arith.addf %18, %23 : vector<128x256xf32>
    %25 = vector.extract_strided_slice %0 {offsets = [0, 3], sizes = [128, 1], strides = [1, 1]} : vector<128x4xf32> to vector<128x1xf32>
    %26 = vector.extract_strided_slice %7 {offsets = [3, 0], sizes = [1, 256], strides = [1, 1]} : vector<4x256xf32> to vector<1x256xf32>
    %27 = vector.broadcast %25 : vector<128x1xf32> to vector<128x256xf32>
    %28 = vector.broadcast %26 : vector<1x256xf32> to vector<128x256xf32>
    %29 = arith.mulf %27, %28 : vector<128x256xf32>
    %30 = arith.addf %24, %29 : vector<128x256xf32>
    %31 = vector.broadcast %1 : vector<128x1xf32> to vector<128x256xf32>
    %32 = arith.addf %30, %31 : vector<128x256xf32>
    %cst = arith.constant 0.000000e+00 : f32
    %33 = vector.broadcast %cst : f32 to vector<128x256xf32>
    %34 = arith.maximumf %32, %33 : vector<128x256xf32>
    %cst_8 = arith.constant dense<0.000000e+00> : vector<1x256xf32>
    %35 = tpu.matmul %2, %34, %cst_8 {dimension_numbers = #tpu.dot_dimension_numbers<[1], [0], [0], [1], [0, 0, 1, 1], [], []>} : vector<1x128xf32>, vector<128x256xf32>, vector<1x256xf32> -> vector<1x256xf32>
    %36 = vector.broadcast %3 : vector<1x1xf32> to vector<1x256xf32>
    %37 = arith.addf %35, %36 : vector<1x256xf32>
    %cst_9 = arith.constant 0.000000e+00 : f32
    %38 = vector.broadcast %cst_9 : f32 to vector<1x256xf32>
    %39 = arith.subf %38, %37 : vector<1x256xf32>
    %40 = math.exp %39 : vector<1x256xf32>
    %cst_10 = arith.constant 1.000000e+00 : f32
    %41 = vector.broadcast %cst_10 : f32 to vector<1x256xf32>
    %42 = arith.addf %41, %40 : vector<1x256xf32>
    %cst_11 = arith.constant 1.000000e+00 : f32
    %43 = vector.broadcast %cst_11 : f32 to vector<1x256xf32>
    %44 = arith.divf %43, %42 : vector<1x256xf32>
    %cst_12 = arith.constant 1.000000e+00 : f32
    %45 = vector.broadcast %cst_12 : f32 to vector<1x256xf32>
    %46 = arith.subf %45, %44 : vector<1x256xf32>
    %47 = tpu.concatenate %46, %44 in 0 : vector<1x256xf32>, vector<1x256xf32> -> vector<2x256xf32>
    %c0_13 = arith.constant 0 : index
    %48 = arith.index_cast %5 : i32 to index
    %49 = vector.load %arg6[%c0_13, %48] : memref<2x256xf32, #tpu.memory_space<vmem>>, vector<2x256xf32>
    tpu.vector_store %arg6[%c0_13, %48], %47 {strides = array<i32>} : memref<2x256xf32, #tpu.memory_space<vmem>>, vector<2x256xf32>,
    %c1_i32 = arith.constant 1 : i32
    return
  }
  func.func @transform_0(%arg0: i32) -> (i32, i32) {
    %c0_i32 = arith.constant 0 : i32
    %c0_i32_0 = arith.constant 0 : i32
    return %c0_i32, %arg0 : i32, i32
  }
  func.func @transform_1(%arg0: i32) -> (i32, i32) {
    %c0_i32 = arith.constant 0 : i32
    %c0_i32_0 = arith.constant 0 : i32
    %c0_i32_1 = arith.constant 0 : i32
    return %c0_i32, %c0_i32_0 : i32, i32
  }
  func.func @transform_2(%arg0: i32) -> (i32, i32) {
    %c0_i32 = arith.constant 0 : i32
    %c0_i32_0 = arith.constant 0 : i32
    %c0_i32_1 = arith.constant 0 : i32
    return %c0_i32, %c0_i32_0 : i32, i32
  }
  func.func @transform_3(%arg0: i32) -> (i32, i32) {
    %c0_i32 = arith.constant 0 : i32
    %c0_i32_0 = arith.constant 0 : i32
    %c0_i32_1 = arith.constant 0 : i32
    return %c0_i32, %c0_i32_0 : i32, i32
  }
  func.func @transform_4(%arg0: i32) -> (i32, i32) {
    %c0_i32 = arith.constant 0 : i32
    %c0_i32_0 = arith.constant 0 : i32
    %c0_i32_1 = arith.constant 0 : i32
    return %c0_i32, %c0_i32_0 : i32, i32
  }
  func.func @transform_5(%arg0: i32) -> (i32, i32) {
    %c0_i32 = arith.constant 0 : i32
    %c0_i32_0 = arith.constant 0 : i32
    return %c0_i32, %arg0 : i32, i32
  }
}

</mosaic_0001>

<llo_original>
// kernel: tpu_custom_call.1
$region0: #{tpu_custom_call.1}
  #allocation0 [shape = 'u32[]', space=smem, size = 0x4, offset = 0x4, fixed_abs, tag = 'smem constant byte address 0x4 - core index']
  #allocation1 [shape = 'u32[72,128]{1,0:T(1,128)}', space=vmem, size = 0x9000, scoped, tag = 'internal scratch']
  #allocation2 [shape = 'f32[1,1]{1,0:T(1,128)S(1)}', space=vmem, size = 0x200, scoped, tag = 'scoped memory for tpu_custom_call.1']
  %s0 = inlined_call_operand.vmem [shape: f32[4,256], index: 0, kind: input, shape index: {}]
  %s1 = inlined_call_operand.vmem [shape: f32[128,4], index: 1, kind: input, shape index: {}]
  %s2 = inlined_call_operand.vmem [shape: f32[128,1], index: 2, kind: input, shape index: {}]
  %s3 = inlined_call_operand.vmem [shape: f32[1,128], index: 3, kind: input, shape index: {}]
  %s4 = inlined_call_operand.<no memory space> [shape: f32[1,1], index: 4, kind: input, shape index: {}]
  %s5 = inlined_call_operand.hbm [shape: f32[2,256], index: 5, kind: output, shape index: {}]
  %s6 = sld [smem:[#allocation0]]
  $region30: #{tpu_custom_call.1} parent=0
    _
  %s8 = ssub.s32 1, %s6
  %s9 = scalar_select 0, %s8, %s6
  %v10 = vstv %s4
  %11 = vst [vmem:[#allocation2] sm:$0x1] %v10
  $region1: #{tpu_custom_call.1} parent=0
    #allocation3 [shape = 'u8[2048]{0}', space=vmem, size = 0x800, scoped, tag = 'output window, operand 0, single buffered']
    #allocation4 [shape = 's32[1]{0}', space=sflag, size = 0x4, scoped, tag = 'scoped memory for tpu_custom_call.1']
    %12 = vsyncpa [#allocation4], 0
    // Predicated region
    $region2: #{tpu_custom_call.1} parent=1 // pred_check
      _
    $region3: #{tpu_custom_call.1} parent=1 // pred_check_branch
      %14 = sbr.rel (0) target = $region5
    $region4: #{tpu_custom_call.1} parent=1 // pred_region
      _
    $region5: #{tpu_custom_call.1} parent=1 // pred_fallthru
      _
    // Predicated region
    $region6: #{tpu_custom_call.1} parent=1 // pred_check
      _
    $region7: #{tpu_custom_call.1} parent=1 // pred_check_branch
      %16 = sbr.rel (0) target = $region9
    $region8: #{tpu_custom_call.1} parent=1 // pred_region
      _
    $region9: #{tpu_custom_call.1} parent=1 // pred_fallthru
      _
    // Predicated region
    $region10: #{tpu_custom_call.1} parent=1 // pred_check
      _
    $region11: #{tpu_custom_call.1} parent=1 // pred_check_branch
      %18 = sbr.rel (0) target = $region13
    $region12: #{tpu_custom_call.1} parent=1 // pred_region
      _
    $region13: #{tpu_custom_call.1} parent=1 // pred_fallthru
      _
    // Predicated region
    $region14: #{tpu_custom_call.1} parent=1 // pred_check
      _
    $region15: #{tpu_custom_call.1} parent=1 // pred_check_branch
      %20 = sbr.rel (0) target = $region17
    $region16: #{tpu_custom_call.1} parent=1 // pred_region
      _
    $region17: #{tpu_custom_call.1} parent=1 // pred_fallthru
      _
    // Predicated region
    $region18: #{tpu_custom_call.1} parent=1 // pred_check
      _
    $region19: #{tpu_custom_call.1} parent=1 // pred_check_branch
      %22 = sbr.rel (0) target = $region21
    $region20: #{tpu_custom_call.1} parent=1 // pred_region
      _
    $region21: #{tpu_custom_call.1} parent=1 // pred_fallthru
      _
    %v23 = vld [vmem:[%s1] sm:$0xff]
    %v24 = vld [vmem:[%s1 + $0x8] sm:$0xff]
    %v25 = vld [vmem:[%s1 + $0x10] sm:$0xff]
    %v26 = vld [vmem:[%s1 + $0x18] sm:$0xff]
    %v27 = vld [vmem:[%s1 + $0x20] sm:$0xff]
    %v28 = vld [vmem:[%s1 + $0x28] sm:$0xff]
    %v29 = vld [vmem:[%s1 + $0x30] sm:$0xff]
    %v30 = vld [vmem:[%s1 + $0x38] sm:$0xff]
    %v31 = vld [vmem:[%s1 + $0x40] sm:$0xff]
    %v32 = vld [vmem:[%s1 + $0x48] sm:$0xff]
    %v33 = vld [vmem:[%s1 + $0x50] sm:$0xff]
    %v34 = vld [vmem:[%s1 + $0x58] sm:$0xff]
    %v35 = vld [vmem:[%s1 + $0x60] sm:$0xff]
    %v36 = vld [vmem:[%s1 + $0x68] sm:$0xff]
    %v37 = vld [vmem:[%s1 + $0x70] sm:$0xff]
    %v38 = vld [vmem:[%s1 + $0x78] sm:$0xff]
    %v39 = vld [vmem:[%s2] sm:$0xff]
    %v40 = vld [vmem:[%s2 + $0x8] sm:$0xff]
    %v41 = vld [vmem:[%s2 + $0x10] sm:$0xff]
    %v42 = vld [vmem:[%s2 + $0x18] sm:$0xff]
    %v43 = vld [vmem:[%s2 + $0x20] sm:$0xff]
    %v44 = vld [vmem:[%s2 + $0x28] sm:$0xff]
    %v45 = vld [vmem:[%s2 + $0x30] sm:$0xff]
    %v46 = vld [vmem:[%s2 + $0x38] sm:$0xff]
    %v47 = vld [vmem:[%s2 + $0x40] sm:$0xff]
    %v48 = vld [vmem:[%s2 + $0x48] sm:$0xff]
    %v49 = vld [vmem:[%s2 + $0x50] sm:$0xff]
    %v50 = vld [vmem:[%s2 + $0x58] sm:$0xff]
    %v51 = vld [vmem:[%s2 + $0x60] sm:$0xff]
    %v52 = vld [vmem:[%s2 + $0x68] sm:$0xff]
    %v53 = vld [vmem:[%s2 + $0x70] sm:$0xff]
    %v54 = vld [vmem:[%s2 + $0x78] sm:$0xff]
    %v55 = vld [vmem:[%s3] sm:$0x1]
    %v56 = vld [vmem:[#allocation2] sm:$0x1]
    %v57 = vld [vmem:[%s0] sm:$0xff]
    %59 = vset.pattern.permute.xlu0 0
    %60 = vperm.xlu0 %59, %v23
    %v61 = vpop.permute.xlu0 %60
    %64 = vset.pattern.permute.xlu0 0
    %65 = vperm.xlu0 %64, %v24
    %v66 = vpop.permute.xlu0 %65
    %69 = vset.pattern.permute.xlu0 0
    %70 = vperm.xlu0 %69, %v25
    %v71 = vpop.permute.xlu0 %70
    %74 = vset.pattern.permute.xlu0 0
    %75 = vperm.xlu0 %74, %v26
    %v76 = vpop.permute.xlu0 %75
    %79 = vset.pattern.permute.xlu0 0
    %80 = vperm.xlu0 %79, %v27
    %v81 = vpop.permute.xlu0 %80
    %84 = vset.pattern.permute.xlu0 0
    %85 = vperm.xlu0 %84, %v28
    %v86 = vpop.permute.xlu0 %85
    %89 = vset.pattern.permute.xlu0 0
    %90 = vperm.xlu0 %89, %v29
    %v91 = vpop.permute.xlu0 %90
    %94 = vset.pattern.permute.xlu0 0
    %95 = vperm.xlu0 %94, %v30
    %v96 = vpop.permute.xlu0 %95
    %99 = vset.pattern.permute.xlu0 0
    %100 = vperm.xlu0 %99, %v31
    %v101 = vpop.permute.xlu0 %100
    %104 = vset.pattern.permute.xlu0 0
    %105 = vperm.xlu0 %104, %v32
    %v106 = vpop.permute.xlu0 %105
    %109 = vset.pattern.permute.xlu0 0
    %110 = vperm.xlu0 %109, %v33
    %v111 = vpop.permute.xlu0 %110
    %114 = vset.pattern.permute.xlu0 0
    %115 = vperm.xlu0 %114, %v34
    %v116 = vpop.permute.xlu0 %115
    %119 = vset.pattern.permute.xlu0 0
    %120 = vperm.xlu0 %119, %v35
    %v121 = vpop.permute.xlu0 %120
    %124 = vset.pattern.permute.xlu0 0
    %125 = vperm.xlu0 %124, %v36
    %v126 = vpop.permute.xlu0 %125
    %129 = vset.pattern.permute.xlu0 0
    %130 = vperm.xlu0 %129, %v37
    %v131 = vpop.permute.xlu0 %130
    %134 = vset.pattern.permute.xlu0 0
    %135 = vperm.xlu0 %134, %v38
    %v136 = vpop.permute.xlu0 %135
    %v139 = vperm.slane %v57, 0
    %v140 = vperm.slane %v57, 4
    %v143 = vperm.slane %v139, 0
    %v144 = vperm.slane %v140, 0
    %v145 = vmul.f32 %v61, %v143
    %v146 = vmul.f32 %v61, %v144
    %v147 = vmul.f32 %v66, %v143
    %v148 = vmul.f32 %v66, %v144
    %v149 = vmul.f32 %v71, %v143
    %v150 = vmul.f32 %v71, %v144
    %v151 = vmul.f32 %v76, %v143
    %v152 = vmul.f32 %v76, %v144
    %v153 = vmul.f32 %v81, %v143
    %v154 = vmul.f32 %v81, %v144
    %v155 = vmul.f32 %v86, %v143
    %v156 = vmul.f32 %v86, %v144
    %v157 = vmul.f32 %v91, %v143
    %v158 = vmul.f32 %v91, %v144
    %v159 = vmul.f32 %v96, %v143
    %v160 = vmul.f32 %v96, %v144
    %v161 = vmul.f32 %v101, %v143
    %v162 = vmul.f32 %v101, %v144
    %v163 = vmul.f32 %v106, %v143
    %v164 = vmul.f32 %v106, %v144
    %v165 = vmul.f32 %v111, %v143
    %v166 = vmul.f32 %v111, %v144
    %v167 = vmul.f32 %v116, %v143
    %v168 = vmul.f32 %v116, %v144
    %v169 = vmul.f32 %v121, %v143
    %v170 = vmul.f32 %v121, %v144
    %v171 = vmul.f32 %v126, %v143
    %v172 = vmul.f32 %v126, %v144
    %v173 = vmul.f32 %v131, %v143
    %v174 = vmul.f32 %v131, %v144
    %v175 = vmul.f32 %v136, %v143
    %v176 = vmul.f32 %v136, %v144
    %177 = vset.pattern.permute.xlu0 1
    %178 = vperm.xlu0 %177, %v23
    %v179 = vpop.permute.xlu0 %178
    %181 = vset.pattern.permute.xlu0 1
    %182 = vperm.xlu0 %181, %v24
    %v183 = vpop.permute.xlu0 %182
    %185 = vset.pattern.permute.xlu0 1
    %186 = vperm.xlu0 %185, %v25
    %v187 = vpop.permute.xlu0 %186
    %189 = vset.pattern.permute.xlu0 1
    %190 = vperm.xlu0 %189, %v26
    %v191 = vpop.permute.xlu0 %190
    %193 = vset.pattern.permute.xlu0 1
    %194 = vperm.xlu0 %193, %v27
    %v195 = vpop.permute.xlu0 %194
    %197 = vset.pattern.permute.xlu0 1
    %198 = vperm.xlu0 %197, %v28
    %v199 = vpop.permute.xlu0 %198
    %201 = vset.pattern.permute.xlu0 1
    %202 = vperm.xlu0 %201, %v29
    %v203 = vpop.permute.xlu0 %202
    %205 = vset.pattern.permute.xlu0 1
    %206 = vperm.xlu0 %205, %v30
    %v207 = vpop.permute.xlu0 %206
    %209 = vset.pattern.permute.xlu0 1
    %210 = vperm.xlu0 %209, %v31
    %v211 = vpop.permute.xlu0 %210
    %213 = vset.pattern.permute.xlu0 1
    %214 = vperm.xlu0 %213, %v32
    %v215 = vpop.permute.xlu0 %214
    %217 = vset.pattern.permute.xlu0 1
    %218 = vperm.xlu0 %217, %v33
    %v219 = vpop.permute.xlu0 %218
    %221 = vset.pattern.permute.xlu0 1
    %222 = vperm.xlu0 %221, %v34
    %v223 = vpop.permute.xlu0 %222
    %225 = vset.pattern.permute.xlu0 1
    %226 = vperm.xlu0 %225, %v35
    %v227 = vpop.permute.xlu0 %226
    %229 = vset.pattern.permute.xlu0 1
    %230 = vperm.xlu0 %229, %v36
    %v231 = vpop.permute.xlu0 %230
    %233 = vset.pattern.permute.xlu0 1
    %234 = vperm.xlu0 %233, %v37
    %v235 = vpop.permute.xlu0 %234
    %237 = vset.pattern.permute.xlu0 1
    %238 = vperm.xlu0 %237, %v38
    %v239 = vpop.permute.xlu0 %238
    %v241 = vperm.slane %v57, 1
    %v242 = vperm.slane %v57, 5
    %v245 = vperm.slane %v241, 1
    %v246 = vperm.slane %v242, 1
    %v247 = vmul.f32 %v179, %v245
    %v248 = vmul.f32 %v179, %v246
    %v249 = vmul.f32 %v183, %v245
    %v250 = vmul.f32 %v183, %v246
    %v251 = vmul.f32 %v187, %v245
    %v252 = vmul.f32 %v187, %v246
    %v253 = vmul.f32 %v191, %v245
    %v254 = vmul.f32 %v191, %v246
    %v255 = vmul.f32 %v195, %v245
    %v256 = vmul.f32 %v195, %v246
    %v257 = vmul.f32 %v199, %v245
    %v258 = vmul.f32 %v199, %v246
    %v259 = vmul.f32 %v203, %v245
    %v260 = vmul.f32 %v203, %v246
    %v261 = vmul.f32 %v207, %v245
    %v262 = vmul.f32 %v207, %v246
    %v263 = vmul.f32 %v211, %v245
    %v264 = vmul.f32 %v211, %v246
    %v265 = vmul.f32 %v215, %v245
    %v266 = vmul.f32 %v215, %v246
    %v267 = vmul.f32 %v219, %v245
    %v268 = vmul.f32 %v219, %v246
    %v269 = vmul.f32 %v223, %v245
    %v270 = vmul.f32 %v223, %v246
    %v271 = vmul.f32 %v227, %v245
    %v272 = vmul.f32 %v227, %v246
    %v273 = vmul.f32 %v231, %v245
    %v274 = vmul.f32 %v231, %v246
    %v275 = vmul.f32 %v235, %v245
    %v276 = vmul.f32 %v235, %v246
    %v277 = vmul.f32 %v239, %v245
    %v278 = vmul.f32 %v239, %v246
    %v279 = vadd.f32 %v145, %v247
    %v280 = vadd.f32 %v146, %v248
    %v281 = vadd.f32 %v147, %v249
    %v282 = vadd.f32 %v148, %v250
    %v283 = vadd.f32 %v149, %v251
    %v284 = vadd.f32 %v150, %v252
    %v285 = vadd.f32 %v151, %v253
    %v286 = vadd.f32 %v152, %v254
    %v287 = vadd.f32 %v153, %v255
    %v288 = vadd.f32 %v154, %v256
    %v289 = vadd.f32 %v155, %v257
    %v290 = vadd.f32 %v156, %v258
    %v291 = vadd.f32 %v157, %v259
    %v292 = vadd.f32 %v158, %v260
    %v293 = vadd.f32 %v159, %v261
    %v294 = vadd.f32 %v160, %v262
    %v295 = vadd.f32 %v161, %v263
    %v296 = vadd.f32 %v162, %v264
    %v297 = vadd.f32 %v163, %v265
    %v298 = vadd.f32 %v164, %v266
    %v299 = vadd.f32 %v165, %v267
    %v300 = vadd.f32 %v166, %v268
    %v301 = vadd.f32 %v167, %v269
    %v302 = vadd.f32 %v168, %v270
    %v303 = vadd.f32 %v169, %v271
    %v304 = vadd.f32 %v170, %v272
    %v305 = vadd.f32 %v171, %v273
    %v306 = vadd.f32 %v172, %v274
    %v307 = vadd.f32 %v173, %v275
    %v308 = vadd.f32 %v174, %v276
    %v309 = vadd.f32 %v175, %v277
    %v310 = vadd.f32 %v176, %v278
    %311 = vset.pattern.permute.xlu0 2
    %312 = vperm.xlu0 %311, %v23
    %v313 = vpop.permute.xlu0 %312
    %315 = vset.pattern.permute.xlu0 2
    %316 = vperm.xlu0 %315, %v24
    %v317 = vpop.permute.xlu0 %316
    %319 = vset.pattern.permute.xlu0 2
    %320 = vperm.xlu0 %319, %v25
    %v321 = vpop.permute.xlu0 %320
    %323 = vset.pattern.permute.xlu0 2
    %324 = vperm.xlu0 %323, %v26
    %v325 = vpop.permute.xlu0 %324
    %327 = vset.pattern.permute.xlu0 2
    %328 = vperm.xlu0 %327, %v27
    %v329 = vpop.permute.xlu0 %328
    %331 = vset.pattern.permute.xlu0 2
    %332 = vperm.xlu0 %331, %v28
    %v333 = vpop.permute.xlu0 %332
    %335 = vset.pattern.permute.xlu0 2
    %336 = vperm.xlu0 %335, %v29
    %v337 = vpop.permute.xlu0 %336
    %339 = vset.pattern.permute.xlu0 2
    %340 = vperm.xlu0 %339, %v30
    %v341 = vpop.permute.xlu0 %340
    %343 = vset.pattern.permute.xlu0 2
    %344 = vperm.xlu0 %343, %v31
    %v345 = vpop.permute.xlu0 %344
    %347 = vset.pattern.permute.xlu0 2
    %348 = vperm.xlu0 %347, %v32
    %v349 = vpop.permute.xlu0 %348
    %351 = vset.pattern.permute.xlu0 2
    %352 = vperm.xlu0 %351, %v33
    %v353 = vpop.permute.xlu0 %352
    %355 = vset.pattern.permute.xlu0 2
    %356 = vperm.xlu0 %355, %v34
    %v357 = vpop.permute.xlu0 %356
    %359 = vset.pattern.permute.xlu0 2
    %360 = vperm.xlu0 %359, %v35
    %v361 = vpop.permute.xlu0 %360
    %363 = vset.pattern.permute.xlu0 2
    %364 = vperm.xlu0 %363, %v36
    %v365 = vpop.permute.xlu0 %364
    %367 = vset.pattern.permute.xlu0 2
    %368 = vperm.xlu0 %367, %v37
    %v369 = vpop.permute.xlu0 %368
    %371 = vset.pattern.permute.xlu0 2
    %372 = vperm.xlu0 %371, %v38
    %v373 = vpop.permute.xlu0 %372
    %v375 = vperm.slane %v57, 2
    %v376 = vperm.slane %v57, 6
    %v379 = vperm.slane %v375, 2
    %v380 = vperm.slane %v376, 2
    %v381 = vmul.f32 %v313, %v379
    %v382 = vmul.f32 %v313, %v380
    %v383 = vmul.f32 %v317, %v379
    %v384 = vmul.f32 %v317, %v380
    %v385 = vmul.f32 %v321, %v379
    %v386 = vmul.f32 %v321, %v380
    %v387 = vmul.f32 %v325, %v379
    %v388 = vmul.f32 %v325, %v380
    %v389 = vmul.f32 %v329, %v379
    %v390 = vmul.f32 %v329, %v380
    %v391 = vmul.f32 %v333, %v379
    %v392 = vmul.f32 %v333, %v380
    %v393 = vmul.f32 %v337, %v379
    %v394 = vmul.f32 %v337, %v380
    %v395 = vmul.f32 %v341, %v379
    %v396 = vmul.f32 %v341, %v380
    %v397 = vmul.f32 %v345, %v379
    %v398 = vmul.f32 %v345, %v380
    %v399 = vmul.f32 %v349, %v379
    %v400 = vmul.f32 %v349, %v380
    %v401 = vmul.f32 %v353, %v379
    %v402 = vmul.f32 %v353, %v380
    %v403 = vmul.f32 %v357, %v379
    %v404 = vmul.f32 %v357, %v380
    %v405 = vmul.f32 %v361, %v379
    %v406 = vmul.f32 %v361, %v380
    %v407 = vmul.f32 %v365, %v379
    %v408 = vmul.f32 %v365, %v380
    %v409 = vmul.f32 %v369, %v379
    %v410 = vmul.f32 %v369, %v380
    %v411 = vmul.f32 %v373, %v379
    %v412 = vmul.f32 %v373, %v380
    %v413 = vadd.f32 %v279, %v381
    %v414 = vadd.f32 %v280, %v382
    %v415 = vadd.f32 %v281, %v383
    %v416 = vadd.f32 %v282, %v384
    %v417 = vadd.f32 %v283, %v385
    %v418 = vadd.f32 %v284, %v386
    %v419 = vadd.f32 %v285, %v387
    %v420 = vadd.f32 %v286, %v388
    %v421 = vadd.f32 %v287, %v389
    %v422 = vadd.f32 %v288, %v390
    %v423 = vadd.f32 %v289, %v391
    %v424 = vadd.f32 %v290, %v392
    %v425 = vadd.f32 %v291, %v393
    %v426 = vadd.f32 %v292, %v394
    %v427 = vadd.f32 %v293, %v395
    %v428 = vadd.f32 %v294, %v396
    %v429 = vadd.f32 %v295, %v397
    %v430 = vadd.f32 %v296, %v398
    %v431 = vadd.f32 %v297, %v399
    %v432 = vadd.f32 %v298, %v400
    %v433 = vadd.f32 %v299, %v401
    %v434 = vadd.f32 %v300, %v402
    %v435 = vadd.f32 %v301, %v403
    %v436 = vadd.f32 %v302, %v404
    %v437 = vadd.f32 %v303, %v405
    %v438 = vadd.f32 %v304, %v406
    %v439 = vadd.f32 %v305, %v407
    %v440 = vadd.f32 %v306, %v408
    %v441 = vadd.f32 %v307, %v409
    %v442 = vadd.f32 %v308, %v410
    %v443 = vadd.f32 %v309, %v411
    %v444 = vadd.f32 %v310, %v412
    %445 = vset.pattern.permute.xlu0 3
    %446 = vperm.xlu0 %445, %v23
    %v447 = vpop.permute.xlu0 %446
    %449 = vset.pattern.permute.xlu0 3
    %450 = vperm.xlu0 %449, %v24
    %v451 = vpop.permute.xlu0 %450
    %453 = vset.pattern.permute.xlu0 3
    %454 = vperm.xlu0 %453, %v25
    %v455 = vpop.permute.xlu0 %454
    %457 = vset.pattern.permute.xlu0 3
    %458 = vperm.xlu0 %457, %v26
    %v459 = vpop.permute.xlu0 %458
    %461 = vset.pattern.permute.xlu0 3
    %462 = vperm.xlu0 %461, %v27
    %v463 = vpop.permute.xlu0 %462
    %465 = vset.pattern.permute.xlu0 3
    %466 = vperm.xlu0 %465, %v28
    %v467 = vpop.permute.xlu0 %466
    %469 = vset.pattern.permute.xlu0 3
    %470 = vperm.xlu0 %469, %v29
    %v471 = vpop.permute.xlu0 %470
    %473 = vset.pattern.permute.xlu0 3
    %474 = vperm.xlu0 %473, %v30
    %v475 = vpop.permute.xlu0 %474
    %477 = vset.pattern.permute.xlu0 3
    %478 = vperm.xlu0 %477, %v31
    %v479 = vpop.permute.xlu0 %478
    %481 = vset.pattern.permute.xlu0 3
    %482 = vperm.xlu0 %481, %v32
    %v483 = vpop.permute.xlu0 %482
    %485 = vset.pattern.permute.xlu0 3
    %486 = vperm.xlu0 %485, %v33
    %v487 = vpop.permute.xlu0 %486
    %489 = vset.pattern.permute.xlu0 3
    %490 = vperm.xlu0 %489, %v34
    %v491 = vpop.permute.xlu0 %490
    %493 = vset.pattern.permute.xlu0 3
    %494 = vperm.xlu0 %493, %v35
    %v495 = vpop.permute.xlu0 %494
    %497 = vset.pattern.permute.xlu0 3
    %498 = vperm.xlu0 %497, %v36
    %v499 = vpop.permute.xlu0 %498
    %501 = vset.pattern.permute.xlu0 3
    %502 = vperm.xlu0 %501, %v37
    %v503 = vpop.permute.xlu0 %502
    %505 = vset.pattern.permute.xlu0 3
    %506 = vperm.xlu0 %505, %v38
    %v507 = vpop.permute.xlu0 %506
    %v509 = vperm.slane %v57, 3
    %v510 = vperm.slane %v57, 7
    %v513 = vperm.slane %v509, 3
    %v514 = vperm.slane %v510, 3
    %v515 = vmul.f32 %v447, %v513
    %v516 = vmul.f32 %v447, %v514
    %v517 = vmul.f32 %v451, %v513
    %v518 = vmul.f32 %v451, %v514
    %v519 = vmul.f32 %v455, %v513
    %v520 = vmul.f32 %v455, %v514
    %v521 = vmul.f32 %v459, %v513
    %v522 = vmul.f32 %v459, %v514
    %v523 = vmul.f32 %v463, %v513
    %v524 = vmul.f32 %v463, %v514
    %v525 = vmul.f32 %v467, %v513
    %v526 = vmul.f32 %v467, %v514
    %v527 = vmul.f32 %v471, %v513
    %v528 = vmul.f32 %v471, %v514
    %v529 = vmul.f32 %v475, %v513
    %v530 = vmul.f32 %v475, %v514
    %v531 = vmul.f32 %v479, %v513
    %v532 = vmul.f32 %v479, %v514
    %v533 = vmul.f32 %v483, %v513
    %v534 = vmul.f32 %v483, %v514
    %v535 = vmul.f32 %v487, %v513
    %v536 = vmul.f32 %v487, %v514
    %v537 = vmul.f32 %v491, %v513
    %v538 = vmul.f32 %v491, %v514
    %v539 = vmul.f32 %v495, %v513
    %v540 = vmul.f32 %v495, %v514
    %v541 = vmul.f32 %v499, %v513
    %v542 = vmul.f32 %v499, %v514
    %v543 = vmul.f32 %v503, %v513
    %v544 = vmul.f32 %v503, %v514
    %v545 = vmul.f32 %v507, %v513
    %v546 = vmul.f32 %v507, %v514
    %v547 = vadd.f32 %v413, %v515
    %v548 = vadd.f32 %v414, %v516
    %v549 = vadd.f32 %v415, %v517
    %v550 = vadd.f32 %v416, %v518
    %v551 = vadd.f32 %v417, %v519
    %v552 = vadd.f32 %v418, %v520
    %v553 = vadd.f32 %v419, %v521
    %v554 = vadd.f32 %v420, %v522
    %v555 = vadd.f32 %v421, %v523
    %v556 = vadd.f32 %v422, %v524
    %v557 = vadd.f32 %v423, %v525
    %v558 = vadd.f32 %v424, %v526
    %v559 = vadd.f32 %v425, %v527
    %v560 = vadd.f32 %v426, %v528
    %v561 = vadd.f32 %v427, %v529
    %v562 = vadd.f32 %v428, %v530
    %v563 = vadd.f32 %v429, %v531
    %v564 = vadd.f32 %v430, %v532
    %v565 = vadd.f32 %v431, %v533
    %v566 = vadd.f32 %v432, %v534
    %v567 = vadd.f32 %v433, %v535
    %v568 = vadd.f32 %v434, %v536
    %v569 = vadd.f32 %v435, %v537
    %v570 = vadd.f32 %v436, %v538
    %v571 = vadd.f32 %v437, %v539
    %v572 = vadd.f32 %v438, %v540
    %v573 = vadd.f32 %v439, %v541
    %v574 = vadd.f32 %v440, %v542
    %v575 = vadd.f32 %v441, %v543
    %v576 = vadd.f32 %v442, %v544
    %v577 = vadd.f32 %v443, %v545
    %v578 = vadd.f32 %v444, %v546
    %580 = vset.pattern.permute.xlu0 0
    %581 = vperm.xlu0 %580, %v39
    %v582 = vpop.permute.xlu0 %581
    %585 = vset.pattern.permute.xlu0 0
    %586 = vperm.xlu0 %585, %v40
    %v587 = vpop.permute.xlu0 %586
    %590 = vset.pattern.permute.xlu0 0
    %591 = vperm.xlu0 %590, %v41
    %v592 = vpop.permute.xlu0 %591
    %595 = vset.pattern.permute.xlu0 0
    %596 = vperm.xlu0 %595, %v42
    %v597 = vpop.permute.xlu0 %596
    %600 = vset.pattern.permute.xlu0 0
    %601 = vperm.xlu0 %600, %v43
    %v602 = vpop.permute.xlu0 %601
    %605 = vset.pattern.permute.xlu0 0
    %606 = vperm.xlu0 %605, %v44
    %v607 = vpop.permute.xlu0 %606
    %610 = vset.pattern.permute.xlu0 0
    %611 = vperm.xlu0 %610, %v45
    %v612 = vpop.permute.xlu0 %611
    %615 = vset.pattern.permute.xlu0 0
    %616 = vperm.xlu0 %615, %v46
    %v617 = vpop.permute.xlu0 %616
    %620 = vset.pattern.permute.xlu0 0
    %621 = vperm.xlu0 %620, %v47
    %v622 = vpop.permute.xlu0 %621
    %625 = vset.pattern.permute.xlu0 0
    %626 = vperm.xlu0 %625, %v48
    %v627 = vpop.permute.xlu0 %626
    %630 = vset.pattern.permute.xlu0 0
    %631 = vperm.xlu0 %630, %v49
    %v632 = vpop.permute.xlu0 %631
    %635 = vset.pattern.permute.xlu0 0
    %636 = vperm.xlu0 %635, %v50
    %v637 = vpop.permute.xlu0 %636
    %640 = vset.pattern.permute.xlu0 0
    %641 = vperm.xlu0 %640, %v51
    %v642 = vpop.permute.xlu0 %641
    %645 = vset.pattern.permute.xlu0 0
    %646 = vperm.xlu0 %645, %v52
    %v647 = vpop.permute.xlu0 %646
    %650 = vset.pattern.permute.xlu0 0
    %651 = vperm.xlu0 %650, %v53
    %v652 = vpop.permute.xlu0 %651
    %655 = vset.pattern.permute.xlu0 0
    %656 = vperm.xlu0 %655, %v54
    %v657 = vpop.permute.xlu0 %656
    %v659 = vadd.f32 %v547, %v582
    %v660 = vadd.f32 %v548, %v582
    %v661 = vadd.f32 %v549, %v587
    %v662 = vadd.f32 %v550, %v587
    %v663 = vadd.f32 %v551, %v592
    %v664 = vadd.f32 %v552, %v592
    %v665 = vadd.f32 %v553, %v597
    %v666 = vadd.f32 %v554, %v597
    %v667 = vadd.f32 %v555, %v602
    %v668 = vadd.f32 %v556, %v602
    %v669 = vadd.f32 %v557, %v607
    %v670 = vadd.f32 %v558, %v607
    %v671 = vadd.f32 %v559, %v612
    %v672 = vadd.f32 %v560, %v612
    %v673 = vadd.f32 %v561, %v617
    %v674 = vadd.f32 %v562, %v617
    %v675 = vadd.f32 %v563, %v622
    %v676 = vadd.f32 %v564, %v622
    %v677 = vadd.f32 %v565, %v627
    %v678 = vadd.f32 %v566, %v627
    %v679 = vadd.f32 %v567, %v632
    %v680 = vadd.f32 %v568, %v632
    %v681 = vadd.f32 %v569, %v637
    %v682 = vadd.f32 %v570, %v637
    %v683 = vadd.f32 %v571, %v642
    %v684 = vadd.f32 %v572, %v642
    %v685 = vadd.f32 %v573, %v647
    %v686 = vadd.f32 %v574, %v647
    %v687 = vadd.f32 %v575, %v652
    %v688 = vadd.f32 %v576, %v652
    %v689 = vadd.f32 %v577, %v657
    %v690 = vadd.f32 %v578, %v657
    %v691 = vmax.f32 %v659, 0.0
    %v692 = vmax.f32 %v660, 0.0
    %v693 = vmax.f32 %v661, 0.0
    %v694 = vmax.f32 %v662, 0.0
    %v695 = vmax.f32 %v663, 0.0
    %v696 = vmax.f32 %v664, 0.0
    %v697 = vmax.f32 %v665, 0.0
    %v698 = vmax.f32 %v666, 0.0
    %v699 = vmax.f32 %v667, 0.0
    %v700 = vmax.f32 %v668, 0.0
    %v701 = vmax.f32 %v669, 0.0
    %v702 = vmax.f32 %v670, 0.0
    %v703 = vmax.f32 %v671, 0.0
    %v704 = vmax.f32 %v672, 0.0
    %v705 = vmax.f32 %v673, 0.0
    %v706 = vmax.f32 %v674, 0.0
    %v707 = vmax.f32 %v675, 0.0
    %v708 = vmax.f32 %v676, 0.0
    %v709 = vmax.f32 %v677, 0.0
    %v710 = vmax.f32 %v678, 0.0
    %v711 = vmax.f32 %v679, 0.0
    %v712 = vmax.f32 %v680, 0.0
    %v713 = vmax.f32 %v681, 0.0
    %v714 = vmax.f32 %v682, 0.0
    %v715 = vmax.f32 %v683, 0.0
    %v716 = vmax.f32 %v684, 0.0
    %v717 = vmax.f32 %v685, 0.0
    %v718 = vmax.f32 %v686, 0.0
    %v719 = vmax.f32 %v687, 0.0
    %v720 = vmax.f32 %v688, 0.0
    %v721 = vmax.f32 %v689, 0.0
    %v722 = vmax.f32 %v690, 0.0
    %724 = vset.pattern.permute.xlu0 0
    %725 = vperm.xlu0 %724, %v56
    %v726 = vpop.permute.xlu0 %725
    %v728 = vperm.slane %v726, 0
    %729 = vmatpush.msra.mxu0 %v721
    %730 = vmatpush.msra.mxu0 %v719
    %731 = vmatpush.msra.mxu0 %v717
    %732 = vmatpush.msra.mxu0 %v715
    %733 = vmatpush.msra.mxu0 %v713
    %734 = vmatpush.msra.mxu0 %v711
    %735 = vmatpush.msra.mxu0 %v709
    %736 = vmatpush.msra.mxu0 %v707
    %737 = vmatpush.msra.mxu0 %v705
    %738 = vmatpush.msra.mxu0 %v703
    %739 = vmatpush.msra.mxu0 %v701
    %740 = vmatpush.msra.mxu0 %v699
    %741 = vmatpush.msra.mxu0 %v697
    %742 = vmatpush.msra.mxu0 %v695
    %743 = vmatpush.msra.mxu0 %v693
    %744 = vmatpush.msra.mxu0 %v691
    %745 = vmatmul.f32.gmra.mxu0 %v55
    %v746 = vpop.f32.mrf.mxu0
    %v747 = vadd.f32 %v728, %v746
    %748 = vdwg.mxu0
    %749 = vmatpush.msra.mxu0 %v722
    %750 = vmatpush.msra.mxu0 %v720
    %751 = vmatpush.msra.mxu0 %v718
    %752 = vmatpush.msra.mxu0 %v716
    %753 = vmatpush.msra.mxu0 %v714
    %754 = vmatpush.msra.mxu0 %v712
    %755 = vmatpush.msra.mxu0 %v710
    %756 = vmatpush.msra.mxu0 %v708
    %757 = vmatpush.msra.mxu0 %v706
    %758 = vmatpush.msra.mxu0 %v704
    %759 = vmatpush.msra.mxu0 %v702
    %760 = vmatpush.msra.mxu0 %v700
    %761 = vmatpush.msra.mxu0 %v698
    %762 = vmatpush.msra.mxu0 %v696
    %763 = vmatpush.msra.mxu0 %v694
    %764 = vmatpush.msra.mxu0 %v692
    %765 = vmatmul.f32.gmra.mxu0 %v55
    %v766 = vpop.f32.mrf.mxu0
    %v767 = vadd.f32 %v728, %v766
    %768 = vdwg.mxu0
    %v769 = vsub.f32 0.0, %v747
    %v770 = vsub.f32 0.0, %v767
    %v771 = vmul.f32 %v769, 1.442695
    %v772 = vpow.pop %v771
    %v773 = vmul.f32 %v770, 1.442695
    %v774 = vpow.pop %v773
    %v775 = vadd.f32 %v772, 1.0
    %v776 = vadd.f32 %v774, 1.0
    %v777 = vrcp.pop %v775
    %v778 = vmul.f32 %v775, %v777
    %v779 = vsub.f32 1.0, %v778
    %v780 = vmul.f32 %v777, %v779
    %v781 = vadd.f32 %v777, %v780
    %vm782 = vweird.f32 %v775
    %vm783 = vweird.f32 %v777
    %vm784 = vmor %vm782, %vm783
    %v785 = vsel %vm784, %v777, %v781
    %v786 = vand.u32 2147483647, %v775
    %vm787 = vcmp.eq.f32.partialorder %v786, 8.507059e+37
    %v788 = vand.u32 %v775, 2147483648
    %v789 = vor.u32 1.1754944e-38, %v788
    %v790 = vsel %vm787, %v789, %v785
    %v791 = vmul.f32 1.0, %v790
    %v792 = vrcp.pop %v776
    %v793 = vmul.f32 %v776, %v792
    %v794 = vsub.f32 1.0, %v793
    %v795 = vmul.f32 %v792, %v794
    %v796 = vadd.f32 %v792, %v795
    %vm797 = vweird.f32 %v776
    %vm798 = vweird.f32 %v792
    %vm799 = vmor %vm797, %vm798
    %v800 = vsel %vm799, %v792, %v796
    %v801 = vand.u32 2147483647, %v776
    %vm802 = vcmp.eq.f32.partialorder %v801, 8.507059e+37
    %v803 = vand.u32 %v776, 2147483648
    %v804 = vor.u32 1.1754944e-38, %v803
    %v805 = vsel %vm802, %v804, %v800
    %v806 = vmul.f32 1.0, %v805
    %v807 = vsub.f32 1.0, %v791
    %v808 = vsub.f32 1.0, %v806
    %v811 = vrot.slane %v791, 7
    %v812 = vrot.slane %v806, 7
    %vm815 = vcmask 1040384
    %v816 = vsel %vm815, %v807, %v811
    %v817 = vsel %vm815, %v808, %v812
    %v820 = vrot.slane %v817, 6
    %vm821 = vcmask 1041408
    %v822 = vsel %vm821, %v816, %v820
    %824 = vst [vmem:[#allocation3] sm:$0xf] %v822
    // Predicated region
    $region22: #{tpu_custom_call.1} parent=1 // pred_check
      _
    $region23: #{tpu_custom_call.1} parent=1 // pred_check_branch
      %826 = sbr.rel (0) target = $region25
    $region24: #{tpu_custom_call.1} parent=1 // pred_region
      %828 = vsyncadd [#allocation4], 0
      %s830 = sshll.u32 [#allocation3], 4
      %s831 = int_to_ptr.vmem [resolvable:$true] %s830
      %s832 = sshll.u32 %s5, 4
      %s833 = int_to_ptr.hbm [resolvable:$true] %s832
      %835 = dma.vmem_to_hbm [thread:$0]  %s831, 64, %s833, [#allocation4]
    $region25: #{tpu_custom_call.1} parent=1 // pred_fallthru
      _
    // Predicated region
    $region26: #{tpu_custom_call.1} parent=1 // pred_check
      _
    $region27: #{tpu_custom_call.1} parent=1 // pred_check_branch
      %837 = sbr.rel (0) target = $region29
    $region28: #{tpu_custom_call.1} parent=1 // pred_region
      %839 = dma.done [#allocation4], 64
    $region29: #{tpu_custom_call.1} parent=1 // pred_fallthru
      _
    %840 = vsyncpa [#allocation4], 1

</llo_original>
